<compile_context>
chip_gen: v7x
topology: tpu7x:2x2x1
jax: 0.10.0
libtpu: 0.0.40
codegen_flags: <defaults>
</compile_context>

<pallas_src>
import jax
import jax.numpy as jnp
from jax.experimental import pallas as pl
from jax.experimental.pallas import tpu as pltpu

IN_FEATURES = 512
OUT_FEATURES = 10
PADDED_OUT = 128              # MXU-friendly weight lane width
DEFAULT_TILE_B = 2048         # rows per grid step (multiple of 8); v5e-VMEM safe
SMALL_BATCH_THRESHOLD = 256   # below this, XLA's fused dot beats kernel launch cost


def _vgg_fc_kernel(x_ref, w_ref, b_ref, o_ref):
    # x_ref: (tile_b, 512)  w_ref: (512, 128)  b_ref: (1, 10)  o_ref: (tile_b, 10)
    acc = jnp.dot(x_ref[...], w_ref[...], preferred_element_type=jnp.float32)
    o_ref[...] = (acc[:, :OUT_FEATURES] + b_ref[...]).astype(o_ref.dtype)


def prepare_params(weight, bias, dtype=jnp.float32):
    """One-time param prep (do at load time, not per forward call).

    weight: (10, 512) PyTorch layout; bias: (10,).
    Returns weight transposed + zero-padded to (512, 128) in `dtype`
    (pass jnp.bfloat16 here if the features arrive in bf16) and bias as
    a (1, 10) float32 row.
    """
    w_t = weight.T.astype(dtype)                                   # (512, 10)
    w_padded = jnp.zeros((IN_FEATURES, PADDED_OUT), dtype)
    w_padded = w_padded.at[:, :OUT_FEATURES].set(w_t)
    b_row = bias.astype(jnp.float32).reshape(1, OUT_FEATURES)
    return w_padded, b_row


def vgg_fc_forward(feat, w_padded, b_row, tile_b=DEFAULT_TILE_B, use_pallas=None):
    """feat: (B, 512); w_padded: (512, 128); b_row: (1, 10) -> (B, 10)."""
    B = feat.shape[0]
    out_dtype = feat.dtype

    if use_pallas is None:
        use_pallas = B >= SMALL_BATCH_THRESHOLD
    if not use_pallas:
        # Small-batch fallback: pallas_call overhead dominates; let XLA fuse a dot.
        acc = jnp.dot(feat, w_padded[:, :OUT_FEATURES].astype(feat.dtype),
                      preferred_element_type=jnp.float32)
        return (acc + b_row).astype(out_dtype)

    # Batch tile: multiple of 8, no larger than the (rounded-up) batch.
    b_round8 = ((B + 7) // 8) * 8
    tile_b = max(8, (min(int(tile_b), b_round8) // 8) * 8)
    num_tiles = pl.cdiv(B, tile_b)        # ragged last block handled by Pallas

    x_itemsize = jnp.dtype(feat.dtype).itemsize
    w_itemsize = jnp.dtype(w_padded.dtype).itemsize
    o_itemsize = jnp.dtype(out_dtype).itemsize
    cost = pl.CostEstimate(
        flops=2 * B * IN_FEATURES * PADDED_OUT,
        bytes_accessed=(B * IN_FEATURES * x_itemsize            # feat stream (dominant)
                        + IN_FEATURES * PADDED_OUT * w_itemsize
                        + OUT_FEATURES * 4                      # bias
                        + B * OUT_FEATURES * o_itemsize),       # unpadded output
        transcendentals=0,
    )

    return pl.pallas_call(
        _vgg_fc_kernel,
        out_shape=jax.ShapeDtypeStruct((B, OUT_FEATURES), out_dtype),
        grid_spec=pltpu.PrefetchScalarGridSpec(
            num_scalar_prefetch=0,
            grid=(num_tiles,),
            in_specs=[
                # feat: streamed tile-by-tile, double-buffered by Pallas.
                pl.BlockSpec((tile_b, IN_FEATURES), lambda i: (i, 0)),
                # weight / bias: resident across the whole grid.
                pl.BlockSpec((IN_FEATURES, PADDED_OUT), lambda i: (0, 0)),
                pl.BlockSpec((1, OUT_FEATURES), lambda i: (0, 0)),
            ],
            # Unpadded output: last dim == full array dim (10), so the (8,128)
            # rule holds; edge-row stores of the ragged last block are masked.
            out_specs=pl.BlockSpec((tile_b, OUT_FEATURES), lambda i: (i, 0)),
        ),
        compiler_params=pltpu.CompilerParams(
            dimension_semantics=("parallel",),
        ),
        cost_estimate=cost,
    )(feat, w_padded, b_row)


def init_params(key):
    # Deterministic init mimicking nn.Linear default (uniform +/- 1/sqrt(fan_in)),
    # returned in PyTorch layout: weight (10, 512), bias (10,).
    k_w, k_b = jax.random.split(key)
    bound = 1.0 / (IN_FEATURES ** 0.5)
    weight = jax.random.uniform(
        k_w, (OUT_FEATURES, IN_FEATURES), jnp.float32, -bound, bound
    )
    bias = jax.random.uniform(
        k_b, (OUT_FEATURES,), jnp.float32, -bound, bound
    )
    return weight, bias


if __name__ == "__main__":
    key = jax.random.PRNGKey(0)
    k_x, k_p = jax.random.split(key)

    weight, bias = init_params(k_p)
    # Hoisted, one-time param prep (transpose + lane padding).
    w_padded, b_row = prepare_params(weight, bias)

    # 1) Small, exact-tile batch through the Pallas kernel (force it on).
    B = 8
    feat = jax.random.normal(k_x, (B, IN_FEATURES), jnp.float32)
    out = vgg_fc_forward(feat, w_padded, b_row, use_pallas=True)
    out = jax.block_until_ready(out)
    ref = feat @ weight.T + bias
    assert out.shape == (B, OUT_FEATURES)
    assert jnp.allclose(out, ref, atol=1e-4, rtol=1e-4)

    # 2) Ragged batch (not a multiple of the tile): exercises the masked
    #    edge-block path with no wrapper-side padding copy.
    B2 = 12
    feat2 = jax.random.normal(jax.random.PRNGKey(1), (B2, IN_FEATURES), jnp.float32)
    out2 = jax.block_until_ready(
        vgg_fc_forward(feat2, w_padded, b_row, use_pallas=True))
    ref2 = feat2 @ weight.T + bias
    assert out2.shape == (B2, OUT_FEATURES)
    assert jnp.allclose(out2, ref2, atol=1e-4, rtol=1e-4)

    print("KERNEL_OK")
</pallas_src>

<mosaic_0001>
module attributes {stable_mosaic.version = 11 : i64} {
  func.func @_vgg_fc_kernel(%arg0: i32, %arg1: memref<8x512xf32, #tpu.memory_space<vmem>>, %arg2: memref<512x128xf32, #tpu.memory_space<vmem>>, %arg3: memref<1x10xf32, #tpu.memory_space<vmem>>, %arg4: memref<8x10xf32, #tpu.memory_space<vmem>>) attributes {dimension_semantics = [#tpu.dimension_semantics<parallel>], iteration_bounds = array<i64: 1>, scalar_prefetch = 0 : i64, scratch_operands = 0 : i64, tpu.core_type = #tpu.core_type<tc>, window_params = [{transform_indices = @transform_0, window_bounds = array<i64: 8, 512>}, {pipeline_mode = #tpu.pipeline_mode<synchronous>, transform_indices = @transform_1, window_bounds = array<i64: 512, 128>}, {pipeline_mode = #tpu.pipeline_mode<synchronous>, transform_indices = @transform_2, window_bounds = array<i64: 1, 10>}, {transform_indices = @transform_3, window_bounds = array<i64: 8, 10>}]} {
    %c0 = arith.constant 0 : index
    %c0_0 = arith.constant 0 : index
    %0 = vector.load %arg1[%c0, %c0_0] : memref<8x512xf32, #tpu.memory_space<vmem>>, vector<8x512xf32>
    %c0_1 = arith.constant 0 : index
    %c0_2 = arith.constant 0 : index
    %1 = vector.load %arg2[%c0_1, %c0_2] : memref<512x128xf32, #tpu.memory_space<vmem>>, vector<512x128xf32>
    %cst = arith.constant dense<0.000000e+00> : vector<8x128xf32>
    %2 = tpu.matmul %0, %1, %cst {dimension_numbers = #tpu.dot_dimension_numbers<[1], [0], [0], [1], [0, 0, 1, 1], [], []>} : vector<8x512xf32>, vector<512x128xf32>, vector<8x128xf32> -> vector<8x128xf32>
    %3 = vector.extract_strided_slice %2 {offsets = [0, 0], sizes = [8, 10], strides = [1, 1]} : vector<8x128xf32> to vector<8x10xf32>
    %c0_3 = arith.constant 0 : index
    %c0_4 = arith.constant 0 : index
    %4 = vector.load %arg3[%c0_3, %c0_4] : memref<1x10xf32, #tpu.memory_space<vmem>>, vector<1x10xf32>
    %5 = vector.broadcast %4 : vector<1x10xf32> to vector<8x10xf32>
    %6 = arith.addf %3, %5 : vector<8x10xf32>
    %c0_5 = arith.constant 0 : index
    %c0_6 = arith.constant 0 : index
    %7 = vector.load %arg4[%c0_5, %c0_6] : memref<8x10xf32, #tpu.memory_space<vmem>>, vector<8x10xf32>
    tpu.vector_store %arg4[%c0_5, %c0_6], %6 {strides = array<i32>} : memref<8x10xf32, #tpu.memory_space<vmem>>, vector<8x10xf32>,
    return
  }
  func.func @transform_0(%arg0: i32) -> (i32, i32) {
    %c0_i32 = arith.constant 0 : i32
    %c0_i32_0 = arith.constant 0 : i32
    return %arg0, %c0_i32 : i32, i32
  }
  func.func @transform_1(%arg0: i32) -> (i32, i32) {
    %c0_i32 = arith.constant 0 : i32
    %c0_i32_0 = arith.constant 0 : i32
    %c0_i32_1 = arith.constant 0 : i32
    return %c0_i32, %c0_i32_0 : i32, i32
  }
  func.func @transform_2(%arg0: i32) -> (i32, i32) {
    %c0_i32 = arith.constant 0 : i32
    %c0_i32_0 = arith.constant 0 : i32
    %c0_i32_1 = arith.constant 0 : i32
    return %c0_i32, %c0_i32_0 : i32, i32
  }
  func.func @transform_3(%arg0: i32) -> (i32, i32) {
    %c0_i32 = arith.constant 0 : i32
    %c0_i32_0 = arith.constant 0 : i32
    return %arg0, %c0_i32 : i32, i32
  }
}

</mosaic_0001>

<llo_original>
// kernel: tpu_custom_call.1
$region0: #{tpu_custom_call.1}
  #allocation0 [shape = 'u32[]', space=smem, size = 0x4, offset = 0x4, fixed_abs, tag = 'smem constant byte address 0x4 - core index']
  #allocation1 [shape = 'u32[144,128]{1,0:T(1,128)}', space=vmem, size = 0x12000, scoped, tag = 'internal scratch']
  %s0 = inlined_call_operand.hbm [shape: f32[8,512], index: 0, kind: input, shape index: {}]
  %s1 = inlined_call_operand.hbm [shape: f32[512,128], index: 1, kind: input, shape index: {}]
  %s2 = inlined_call_operand.vmem [shape: f32[1,10], index: 2, kind: input, shape index: {}]
  %s3 = inlined_call_operand.hbm [shape: f32[8,10], index: 3, kind: output, shape index: {}]
  %s4 = sld [smem:[#allocation0]]
  $region30: #{tpu_custom_call.1} parent=0
    _
  %s6 = ssub.s32 1, %s4
  %s7 = scalar_select 0, %s6, %s4
  $region1: #{tpu_custom_call.1} parent=0
    #allocation2 [shape = 'u8[16384]{0}', space=vmem, size = 0x4000, scoped, tag = 'input window, operand 0, single buffered']
    #allocation3 [shape = 's32[1]{0}', space=sflag, size = 0x4, scoped, tag = 'scoped memory for tpu_custom_call.1']
    #allocation4 [shape = 's32[1]{0}', space=sflag, size = 0x4, scoped, tag = 'scoped memory for tpu_custom_call.1']
    #allocation5 [shape = 'u8[262144]{0}', space=vmem, size = 0x40000, scoped, tag = 'input window, operand 1, single buffered']
    #allocation6 [shape = 's32[1]{0}', space=sflag, size = 0x4, scoped, tag = 'scoped memory for tpu_custom_call.1']
    #allocation7 [shape = 'u8[4096]{0}', space=vmem, size = 0x1000, scoped, tag = 'output window, operand 0, single buffered']
    %8 = vsyncpa [#allocation3], 0
    %9 = vsyncpa [#allocation6], 0
    %10 = vsyncpa [#allocation4], 0
    // Predicated region
    $region2: #{tpu_custom_call.1} parent=1 // pred_check
      _
    $region3: #{tpu_custom_call.1} parent=1 // pred_check_branch
      %12 = sbr.rel (0) target = $region5
    $region4: #{tpu_custom_call.1} parent=1 // pred_region
      %s14 = ssub.s32 512, 512
      %15 = vsyncadd [#allocation3], %s14
      %s17 = sshll.u32 [#allocation2], 4
      %s18 = int_to_ptr.vmem [resolvable:$true] %s17
      %20 = dma.hbm_to_vmem [thread:$0]  %s0, 512, %s18, [#allocation3]
    $region5: #{tpu_custom_call.1} parent=1 // pred_fallthru
      _
    // Predicated region
    $region6: #{tpu_custom_call.1} parent=1 // pred_check
      _
    $region7: #{tpu_custom_call.1} parent=1 // pred_check_branch
      %22 = sbr.rel (0) target = $region9
    $region8: #{tpu_custom_call.1} parent=1 // pred_region
      %s24 = ssub.s32 8192, 8192
      %25 = vsyncadd [#allocation6], %s24
      %s26 = sshll.u32 [#allocation5], 4
      %s27 = int_to_ptr.vmem [resolvable:$true] %s26
      %32 = dma.hbm_to_vmem [thread:$0]  %s1, 8192, %s27, [#allocation6], 128, 128, 8
    $region9: #{tpu_custom_call.1} parent=1 // pred_fallthru
      _
    // Predicated region
    $region10: #{tpu_custom_call.1} parent=1 // pred_check
      _
    $region11: #{tpu_custom_call.1} parent=1 // pred_check_branch
      %34 = sbr.rel (0) target = $region13
    $region12: #{tpu_custom_call.1} parent=1 // pred_region
      _
    $region13: #{tpu_custom_call.1} parent=1 // pred_fallthru
      _
    // Predicated region
    $region14: #{tpu_custom_call.1} parent=1 // pred_check
      _
    $region15: #{tpu_custom_call.1} parent=1 // pred_check_branch
      %36 = sbr.rel (0) target = $region17
    $region16: #{tpu_custom_call.1} parent=1 // pred_region
      %37 = dma.done [#allocation3], 512
    $region17: #{tpu_custom_call.1} parent=1 // pred_fallthru
      _
    // Predicated region
    $region18: #{tpu_custom_call.1} parent=1 // pred_check
      _
    $region19: #{tpu_custom_call.1} parent=1 // pred_check_branch
      %39 = sbr.rel (0) target = $region21
    $region20: #{tpu_custom_call.1} parent=1 // pred_region
      %40 = dma.done [#allocation6], 8192
    $region21: #{tpu_custom_call.1} parent=1 // pred_fallthru
      _
    %v41 = vld [vmem:[#allocation2] sm:$0xff]
    %v42 = vld [vmem:[#allocation2 + $0x8] sm:$0xff]
    %v43 = vld [vmem:[#allocation2 + $0x10] sm:$0xff]
    %v44 = vld [vmem:[#allocation2 + $0x18] sm:$0xff]
    %v45 = vld [vmem:[#allocation5] sm:$0xff]
    %v46 = vld [vmem:[#allocation5 + $0x8] sm:$0xff]
    %v47 = vld [vmem:[#allocation5 + $0x10] sm:$0xff]
    %v48 = vld [vmem:[#allocation5 + $0x18] sm:$0xff]
    %v49 = vld [vmem:[#allocation5 + $0x20] sm:$0xff]
    %v50 = vld [vmem:[#allocation5 + $0x28] sm:$0xff]
    %v51 = vld [vmem:[#allocation5 + $0x30] sm:$0xff]
    %v52 = vld [vmem:[#allocation5 + $0x38] sm:$0xff]
    %v53 = vld [vmem:[#allocation5 + $0x40] sm:$0xff]
    %v54 = vld [vmem:[#allocation5 + $0x48] sm:$0xff]
    %v55 = vld [vmem:[#allocation5 + $0x50] sm:$0xff]
    %v56 = vld [vmem:[#allocation5 + $0x58] sm:$0xff]
    %v57 = vld [vmem:[#allocation5 + $0x60] sm:$0xff]
    %v58 = vld [vmem:[#allocation5 + $0x68] sm:$0xff]
    %v59 = vld [vmem:[#allocation5 + $0x70] sm:$0xff]
    %v60 = vld [vmem:[#allocation5 + $0x78] sm:$0xff]
    %v61 = vld [vmem:[#allocation5 + $0x80] sm:$0xff]
    %v62 = vld [vmem:[#allocation5 + $0x88] sm:$0xff]
    %v63 = vld [vmem:[#allocation5 + $0x90] sm:$0xff]
    %v64 = vld [vmem:[#allocation5 + $0x98] sm:$0xff]
    %v65 = vld [vmem:[#allocation5 + $0xa0] sm:$0xff]
    %v66 = vld [vmem:[#allocation5 + $0xa8] sm:$0xff]
    %v67 = vld [vmem:[#allocation5 + $0xb0] sm:$0xff]
    %v68 = vld [vmem:[#allocation5 + $0xb8] sm:$0xff]
    %v69 = vld [vmem:[#allocation5 + $0xc0] sm:$0xff]
    %v70 = vld [vmem:[#allocation5 + $0xc8] sm:$0xff]
    %v71 = vld [vmem:[#allocation5 + $0xd0] sm:$0xff]
    %v72 = vld [vmem:[#allocation5 + $0xd8] sm:$0xff]
    %v73 = vld [vmem:[#allocation5 + $0xe0] sm:$0xff]
    %v74 = vld [vmem:[#allocation5 + $0xe8] sm:$0xff]
    %v75 = vld [vmem:[#allocation5 + $0xf0] sm:$0xff]
    %v76 = vld [vmem:[#allocation5 + $0xf8] sm:$0xff]
    %v77 = vld [vmem:[#allocation5 + $0x100] sm:$0xff]
    %v78 = vld [vmem:[#allocation5 + $0x108] sm:$0xff]
    %v79 = vld [vmem:[#allocation5 + $0x110] sm:$0xff]
    %v80 = vld [vmem:[#allocation5 + $0x118] sm:$0xff]
    %v81 = vld [vmem:[#allocation5 + $0x120] sm:$0xff]
    %v82 = vld [vmem:[#allocation5 + $0x128] sm:$0xff]
    %v83 = vld [vmem:[#allocation5 + $0x130] sm:$0xff]
    %v84 = vld [vmem:[#allocation5 + $0x138] sm:$0xff]
    %v85 = vld [vmem:[#allocation5 + $0x140] sm:$0xff]
    %v86 = vld [vmem:[#allocation5 + $0x148] sm:$0xff]
    %v87 = vld [vmem:[#allocation5 + $0x150] sm:$0xff]
    %v88 = vld [vmem:[#allocation5 + $0x158] sm:$0xff]
    %v89 = vld [vmem:[#allocation5 + $0x160] sm:$0xff]
    %v90 = vld [vmem:[#allocation5 + $0x168] sm:$0xff]
    %v91 = vld [vmem:[#allocation5 + $0x170] sm:$0xff]
    %v92 = vld [vmem:[#allocation5 + $0x178] sm:$0xff]
    %v93 = vld [vmem:[#allocation5 + $0x180] sm:$0xff]
    %v94 = vld [vmem:[#allocation5 + $0x188] sm:$0xff]
    %v95 = vld [vmem:[#allocation5 + $0x190] sm:$0xff]
    %v96 = vld [vmem:[#allocation5 + $0x198] sm:$0xff]
    %v97 = vld [vmem:[#allocation5 + $0x1a0] sm:$0xff]
    %v98 = vld [vmem:[#allocation5 + $0x1a8] sm:$0xff]
    %v99 = vld [vmem:[#allocation5 + $0x1b0] sm:$0xff]
    %v100 = vld [vmem:[#allocation5 + $0x1b8] sm:$0xff]
    %v101 = vld [vmem:[#allocation5 + $0x1c0] sm:$0xff]
    %v102 = vld [vmem:[#allocation5 + $0x1c8] sm:$0xff]
    %v103 = vld [vmem:[#allocation5 + $0x1d0] sm:$0xff]
    %v104 = vld [vmem:[#allocation5 + $0x1d8] sm:$0xff]
    %v105 = vld [vmem:[#allocation5 + $0x1e0] sm:$0xff]
    %v106 = vld [vmem:[#allocation5 + $0x1e8] sm:$0xff]
    %v107 = vld [vmem:[#allocation5 + $0x1f0] sm:$0xff]
    %v108 = vld [vmem:[#allocation5 + $0x1f8] sm:$0xff]
    %109 = vmatprep.subr.mxu0 0.0
    %110 = vmatpush1.msra.mxu0 %v45
    %111 = vmatprep.subr.mxu0 0.0
    %112 = vmatpush1.msra.mxu0 %v46
    %113 = vmatprep.subr.mxu0 0.0
    %114 = vmatpush1.msra.mxu0 %v47
    %115 = vmatprep.subr.mxu0 0.0
    %116 = vmatpush1.msra.mxu0 %v48
    %117 = vmatprep.subr.mxu0 0.0
    %118 = vmatpush1.msra.mxu0 %v49
    %119 = vmatprep.subr.mxu0 0.0
    %120 = vmatpush1.msra.mxu0 %v50
    %121 = vmatprep.subr.mxu0 0.0
    %122 = vmatpush1.msra.mxu0 %v51
    %123 = vmatprep.subr.mxu0 0.0
    %124 = vmatpush1.msra.mxu0 %v52
    %125 = vmatprep.subr.mxu0 0.0
    %126 = vmatpush1.msra.mxu0 %v53
    %127 = vmatprep.subr.mxu0 0.0
    %128 = vmatpush1.msra.mxu0 %v54
    %129 = vmatprep.subr.mxu0 0.0
    %130 = vmatpush1.msra.mxu0 %v55
    %131 = vmatprep.subr.mxu0 0.0
    %132 = vmatpush1.msra.mxu0 %v56
    %133 = vmatprep.subr.mxu0 0.0
    %134 = vmatpush1.msra.mxu0 %v57
    %135 = vmatprep.subr.mxu0 0.0
    %136 = vmatpush1.msra.mxu0 %v58
    %137 = vmatprep.subr.mxu0 0.0
    %138 = vmatpush1.msra.mxu0 %v59
    %139 = vmatprep.subr.mxu0 0.0
    %140 = vmatpush1.msra.mxu0 %v60
    %141 = vmatprep.subr.mxu0 0.0
    %142 = vmatpush1.msra.mxu0 %v61
    %143 = vmatprep.subr.mxu0 0.0
    %144 = vmatpush1.msra.mxu0 %v62
    %145 = vmatprep.subr.mxu0 0.0
    %146 = vmatpush1.msra.mxu0 %v63
    %147 = vmatprep.subr.mxu0 0.0
    %148 = vmatpush1.msra.mxu0 %v64
    %149 = vmatprep.subr.mxu0 0.0
    %150 = vmatpush1.msra.mxu0 %v65
    %151 = vmatprep.subr.mxu0 0.0
    %152 = vmatpush1.msra.mxu0 %v66
    %153 = vmatprep.subr.mxu0 0.0
    %154 = vmatpush1.msra.mxu0 %v67
    %155 = vmatprep.subr.mxu0 0.0
    %156 = vmatpush1.msra.mxu0 %v68
    %157 = vmatprep.subr.mxu0 0.0
    %158 = vmatpush1.msra.mxu0 %v69
    %159 = vmatprep.subr.mxu0 0.0
    %160 = vmatpush1.msra.mxu0 %v70
    %161 = vmatprep.subr.mxu0 0.0
    %162 = vmatpush1.msra.mxu0 %v71
    %163 = vmatprep.subr.mxu0 0.0
    %164 = vmatpush1.msra.mxu0 %v72
    %165 = vmatprep.subr.mxu0 0.0
    %166 = vmatpush1.msra.mxu0 %v73
    %167 = vmatprep.subr.mxu0 0.0
    %168 = vmatpush1.msra.mxu0 %v74
    %169 = vmatprep.subr.mxu0 0.0
    %170 = vmatpush1.msra.mxu0 %v75
    %171 = vmatprep.subr.mxu0 0.0
    %172 = vmatpush1.msra.mxu0 %v76
    %173 = vmatprep.mubr.f32.mxu0 %v42
    %174 = vmatmul.mubr.f32.gmra.mrb[0].mxu0 %v41
    %v175 = vpop.f32.mrb[0].mxu0
    %v176 = vadd.f32 0.0, %v175
    %v177 = vpop.f32.mrb[0].mxu0
    %178 = vdwg.mxu0
    %179 = vmatprep.subr.mxu0 0.0
    %180 = vmatpush1.msra.mxu0 %v77
    %181 = vmatprep.subr.mxu0 0.0
    %182 = vmatpush1.msra.mxu0 %v78
    %183 = vmatprep.subr.mxu0 0.0
    %184 = vmatpush1.msra.mxu0 %v79
    %185 = vmatprep.subr.mxu0 0.0
    %186 = vmatpush1.msra.mxu0 %v80
    %187 = vmatprep.subr.mxu0 0.0
    %188 = vmatpush1.msra.mxu0 %v81
    %189 = vmatprep.subr.mxu0 0.0
    %190 = vmatpush1.msra.mxu0 %v82
    %191 = vmatprep.subr.mxu0 0.0
    %192 = vmatpush1.msra.mxu0 %v83
    %193 = vmatprep.subr.mxu0 0.0
    %194 = vmatpush1.msra.mxu0 %v84
    %195 = vmatprep.subr.mxu0 0.0
    %196 = vmatpush1.msra.mxu0 %v85
    %197 = vmatprep.subr.mxu0 0.0
    %198 = vmatpush1.msra.mxu0 %v86
    %199 = vmatprep.subr.mxu0 0.0
    %200 = vmatpush1.msra.mxu0 %v87
    %201 = vmatprep.subr.mxu0 0.0
    %202 = vmatpush1.msra.mxu0 %v88
    %203 = vmatprep.subr.mxu0 0.0
    %204 = vmatpush1.msra.mxu0 %v89
    %205 = vmatprep.subr.mxu0 0.0
    %206 = vmatpush1.msra.mxu0 %v90
    %207 = vmatprep.subr.mxu0 0.0
    %208 = vmatpush1.msra.mxu0 %v91
    %209 = vmatprep.subr.mxu0 0.0
    %210 = vmatpush1.msra.mxu0 %v92
    %211 = vmatprep.subr.mxu0 0.0
    %212 = vmatpush1.msra.mxu0 %v93
    %213 = vmatprep.subr.mxu0 0.0
    %214 = vmatpush1.msra.mxu0 %v94
    %215 = vmatprep.subr.mxu0 0.0
    %216 = vmatpush1.msra.mxu0 %v95
    %217 = vmatprep.subr.mxu0 0.0
    %218 = vmatpush1.msra.mxu0 %v96
    %219 = vmatprep.subr.mxu0 0.0
    %220 = vmatpush1.msra.mxu0 %v97
    %221 = vmatprep.subr.mxu0 0.0
    %222 = vmatpush1.msra.mxu0 %v98
    %223 = vmatprep.subr.mxu0 0.0
    %224 = vmatpush1.msra.mxu0 %v99
    %225 = vmatprep.subr.mxu0 0.0
    %226 = vmatpush1.msra.mxu0 %v100
    %227 = vmatprep.subr.mxu0 0.0
    %228 = vmatpush1.msra.mxu0 %v101
    %229 = vmatprep.subr.mxu0 0.0
    %230 = vmatpush1.msra.mxu0 %v102
    %231 = vmatprep.subr.mxu0 0.0
    %232 = vmatpush1.msra.mxu0 %v103
    %233 = vmatprep.subr.mxu0 0.0
    %234 = vmatpush1.msra.mxu0 %v104
    %235 = vmatprep.subr.mxu0 0.0
    %236 = vmatpush1.msra.mxu0 %v105
    %237 = vmatprep.subr.mxu0 0.0
    %238 = vmatpush1.msra.mxu0 %v106
    %239 = vmatprep.subr.mxu0 0.0
    %240 = vmatpush1.msra.mxu0 %v107
    %241 = vmatprep.subr.mxu0 0.0
    %242 = vmatpush1.msra.mxu0 %v108
    %243 = vmatprep.mubr.f32.mxu0 %v44
    %244 = vmatmul.mubr.f32.gmra.mrb[0].mxu0 %v43
    %v245 = vpop.f32.mrb[0].mxu0
    %v246 = vadd.f32 %v176, %v245
    %v247 = vpop.f32.mrb[0].mxu0
    %248 = vdwg.mxu0
    %v249 = vld [vmem:[%s2] sm:$0x1]
    %v251 = vlaneseq
    %v252 = vshrl.u32 %v251, 7
    %v253 = vsub.s32 0, %v252
    %v254 = vrot.slane %v249, %v253
    %v256 = vadd.f32 %v246, %v254
    %vm257 = vcmask 80896
    %258 = vst.msk [vmem:[#allocation7] sm:$0xff] %vm257, %v256
    // Predicated region
    $region22: #{tpu_custom_call.1} parent=1 // pred_check
      _
    $region23: #{tpu_custom_call.1} parent=1 // pred_check_branch
      %260 = sbr.rel (0) target = $region25
    $region24: #{tpu_custom_call.1} parent=1 // pred_region
      %s262 = ssub.s32 128, 128
      %263 = vsyncadd [#allocation4], %s262
      %s265 = sshll.u32 [#allocation7], 4
      %s266 = int_to_ptr.vmem [resolvable:$true] %s265
      %268 = dma.vmem_to_hbm [thread:$0]  %s266, 128, %s3, [#allocation4]
    $region25: #{tpu_custom_call.1} parent=1 // pred_fallthru
      _
    // Predicated region
    $region26: #{tpu_custom_call.1} parent=1 // pred_check
      _
    $region27: #{tpu_custom_call.1} parent=1 // pred_check_branch
      %270 = sbr.rel (0) target = $region29
    $region28: #{tpu_custom_call.1} parent=1 // pred_region
      %271 = dma.done [#allocation4], 128
    $region29: #{tpu_custom_call.1} parent=1 // pred_fallthru
      _
    %272 = vsyncpa [#allocation3], 1
    %273 = vsyncpa [#allocation6], 1
    %274 = vsyncpa [#allocation4], 1

</llo_original>
